<compile_context>
chip_gen: v5e
topology: v5e:2x2
jax: 0.10.0
libtpu: 0.0.40
codegen_flags: <defaults>
</compile_context>

<pallas_src>
import math

import jax
import jax.numpy as jnp
from jax import lax
from jax.experimental import pallas as pl
from jax.experimental.pallas import tpu as pltpu


def _round_up(x: int, m: int) -> int:
    return ((x + m - 1) // m) * m


def build_position_encoding_table(dim: int, max_len: int = 128) -> jnp.ndarray:
    """Exact replica of the PyTorch __init__ table construction
    (the original intentionally has no negative sign in the exponent)."""
    position = jnp.arange(0, max_len, dtype=jnp.float32)[:, None]
    divide_term = jnp.exp(
        jnp.arange(0, dim, 2, dtype=jnp.float32) * math.log(10000.0) / dim)
    divide_term_ = jnp.exp(
        jnp.arange(0, dim - 1, 2, dtype=jnp.float32) * math.log(10000.0) / dim)
    pe = jnp.zeros((max_len, dim), dtype=jnp.float32)
    pe = pe.at[:, 0::2].set(jnp.sin(position * divide_term))
    pe = pe.at[:, 1::2].set(jnp.cos(position * divide_term_))
    return pe


def _prepare_packed_table(table: jnp.ndarray):
    """Init-time work: block-diagonal gather matrix.

    Returns (tbig, pack, L) with tbig shape (pack*L, pack*dim) and
    tbig[j*L + m, j*dim:(j+1)*dim] = table[m, :].
    """
    max_len, dim = table.shape
    pack = (128 // dim) if (dim <= 128 and 128 % dim == 0) else 1
    L = _round_up(max_len, 128)            # lane-aligned contraction axis
    table_p = table if L == max_len else jnp.pad(table, ((0, L - max_len), (0, 0)))
    tbig = jnp.zeros((pack * L, pack * dim), table.dtype)
    for j in range(pack):
        tbig = tbig.at[j * L:(j + 1) * L, j * dim:(j + 1) * dim].set(table_p)
    return tbig, pack, L


def _onehot_gather_kernel(pos_ref, tbl_ref, out_ref):
    """pos_ref: VMEM (TN, pack) int32; tbl_ref: VMEM (pack*L, pack*dim) block-diag table;
    out_ref: VMEM (TN, pack*dim).  out[r, j*dim:(j+1)*dim] = table[pos[r, j], :]."""
    tn, pack = pos_ref.shape
    L = tbl_ref.shape[0] // pack

    pos = pos_ref[...]                                          # (TN, pack) int32
    iota = lax.broadcasted_iota(jnp.int32, (tn, L), 1)          # (TN, L) column ids
    parts = [(iota == pos[:, j:j + 1]).astype(tbl_ref.dtype) for j in range(pack)]
    onehot = parts[0] if pack == 1 else jnp.concatenate(parts, axis=1)   # (TN, pack*L)

    # Single MXU contraction per tile; HIGHEST keeps the f32 table values exact
    # through the one-hot matmul.  Output rows are full 128 lanes (unmasked vst).
    out_ref[...] = jnp.dot(
        onehot, tbl_ref[...],
        precision=lax.Precision.HIGHEST,
        preferred_element_type=jnp.float32,
    ).astype(out_ref.dtype)


def positional_encoding_forward(position: jnp.ndarray, table: jnp.ndarray,
                                *, rows_per_tile: int = 256) -> jnp.ndarray:
    """Equivalent of PositionalEncoding.forward(position) = table[position, :]."""
    # NOTE: for tiny standalone calls a plain XLA gather (table[position]) beats any
    # custom call; the Pallas path is kept as the point of this exercise and for
    # large / fused N.
    max_len, dim = table.shape
    orig_shape = position.shape

    tbig, pack, L = _prepare_packed_table(table)

    flat = position.reshape(-1).astype(jnp.int32)
    flat = jnp.where(flat < 0, flat + max_len, flat)   # torch-style negative indexing
    flat = jnp.clip(flat, 0, max_len - 1)              # safety: no silent OOB VMEM reads
    n = flat.shape[0]

    rows = pl.cdiv(n, pack)                            # packed (128-lane) output rows
    tile_rows = min(rows_per_tile, _round_up(rows, 8)) # (TN,128) f32 tile — VMEM-cheap on v7x too
    rows_pad = _round_up(rows, tile_rows)
    flat = jnp.pad(flat, (0, rows_pad * pack - n))     # pad with clamped index 0, sliced off later
    pos2d = flat.reshape(rows_pad, pack)

    out = pl.pallas_call(
        _onehot_gather_kernel,
        out_shape=jax.ShapeDtypeStruct((rows_pad, pack * dim), table.dtype),
        grid=(rows_pad // tile_rows,),
        in_specs=[
            pl.BlockSpec((tile_rows, pack), lambda i: (i, 0)),        # positions, tiled along N
            pl.BlockSpec((pack * L, pack * dim), lambda i: (0, 0)),   # table, VMEM-resident
        ],
        out_specs=pl.BlockSpec((tile_rows, pack * dim), lambda i: (i, 0)),
        compiler_params=pltpu.CompilerParams(
            dimension_semantics=("parallel",)),        # v7x: shard row tiles across 2 TCs
    )(pos2d, tbig)

    out = out.reshape(rows_pad * pack, dim)[:n]
    return out.reshape(orig_shape + (dim,))


if __name__ == "__main__":
    DIM = 32
    MAX_LEN = 128

    # Deterministic "parameter" (the sinusoidal table) built in-script.
    table = build_position_encoding_table(DIM, MAX_LEN)

    # Deterministic example input: integer position indices, shape (batch=2, seq=8).
    key = jax.random.PRNGKey(0)
    position = jax.random.randint(key, (2, 8), minval=0, maxval=MAX_LEN, dtype=jnp.int32)

    out = positional_encoding_forward(position, table)
    out = jax.block_until_ready(out)

    # Reference check against plain-JAX gather (same semantics as torch indexing).
    ref = table[position, :]
    assert out.shape == (2, 8, DIM)
    assert jnp.allclose(out, ref, atol=1e-6, rtol=0), "mismatch vs reference gather"

    print("KERNEL_OK")
</pallas_src>

<mosaic_0001>
module attributes {stable_mosaic.version = 11 : i64} {
  func.func @_onehot_gather_kernel(%arg0: i32, %arg1: memref<8x4xi32, #tpu.memory_space<vmem>>, %arg2: memref<512x128xf32, #tpu.memory_space<vmem>>, %arg3: memref<8x128xf32, #tpu.memory_space<vmem>>) attributes {dimension_semantics = [#tpu.dimension_semantics<parallel>], iteration_bounds = array<i64: 1>, scalar_prefetch = 0 : i64, scratch_operands = 0 : i64, tpu.core_type = #tpu.core_type<tc>, window_params = [{transform_indices = @transform_0, window_bounds = array<i64: 8, 4>}, {pipeline_mode = #tpu.pipeline_mode<synchronous>, transform_indices = @transform_1, window_bounds = array<i64: 512, 128>}, {transform_indices = @transform_2, window_bounds = array<i64: 8, 128>}]} {
    %c0 = arith.constant 0 : index
    %c0_0 = arith.constant 0 : index
    %0 = vector.load %arg1[%c0, %c0_0] : memref<8x4xi32, #tpu.memory_space<vmem>>, vector<8x4xi32>
    %1 = tpu.iota {dimensions = array<i32: 1>} : vector<8x128xi32>
    %2 = vector.extract_strided_slice %0 {offsets = [0, 0], sizes = [8, 1], strides = [1, 1]} : vector<8x4xi32> to vector<8x1xi32>
    %3 = vector.broadcast %2 : vector<8x1xi32> to vector<8x128xi32>
    %4 = arith.cmpi eq, %1, %3 : vector<8x128xi32>
    %5 = arith.extui %4 : vector<8x128xi1> to vector<8x128xi32>
    %6 = arith.sitofp %5 : vector<8x128xi32> to vector<8x128xf32>
    %7 = vector.extract_strided_slice %0 {offsets = [0, 1], sizes = [8, 1], strides = [1, 1]} : vector<8x4xi32> to vector<8x1xi32>
    %8 = vector.broadcast %7 : vector<8x1xi32> to vector<8x128xi32>
    %9 = arith.cmpi eq, %1, %8 : vector<8x128xi32>
    %10 = arith.extui %9 : vector<8x128xi1> to vector<8x128xi32>
    %11 = arith.sitofp %10 : vector<8x128xi32> to vector<8x128xf32>
    %12 = vector.extract_strided_slice %0 {offsets = [0, 2], sizes = [8, 1], strides = [1, 1]} : vector<8x4xi32> to vector<8x1xi32>
    %13 = vector.broadcast %12 : vector<8x1xi32> to vector<8x128xi32>
    %14 = arith.cmpi eq, %1, %13 : vector<8x128xi32>
    %15 = arith.extui %14 : vector<8x128xi1> to vector<8x128xi32>
    %16 = arith.sitofp %15 : vector<8x128xi32> to vector<8x128xf32>
    %17 = vector.extract_strided_slice %0 {offsets = [0, 3], sizes = [8, 1], strides = [1, 1]} : vector<8x4xi32> to vector<8x1xi32>
    %18 = vector.broadcast %17 : vector<8x1xi32> to vector<8x128xi32>
    %19 = arith.cmpi eq, %1, %18 : vector<8x128xi32>
    %20 = arith.extui %19 : vector<8x128xi1> to vector<8x128xi32>
    %21 = arith.sitofp %20 : vector<8x128xi32> to vector<8x128xf32>
    %22 = tpu.concatenate %6, %11, %16, %21 in 1 : vector<8x128xf32>, vector<8x128xf32>, vector<8x128xf32>, vector<8x128xf32> -> vector<8x512xf32>
    %c0_1 = arith.constant 0 : index
    %c0_2 = arith.constant 0 : index
    %23 = vector.load %arg2[%c0_1, %c0_2] : memref<512x128xf32, #tpu.memory_space<vmem>>, vector<512x128xf32>
    %cst = arith.constant dense<0.000000e+00> : vector<8x128xf32>
    %24 = tpu.matmul %22, %23, %cst {dimension_numbers = #tpu.dot_dimension_numbers<[1], [0], [0], [1], [0, 0, 1, 1], [], []>, precision = #tpu.contract_precision<fp32>} : vector<8x512xf32>, vector<512x128xf32>, vector<8x128xf32> -> vector<8x128xf32>
    %c0_3 = arith.constant 0 : index
    %c0_4 = arith.constant 0 : index
    %25 = vector.load %arg3[%c0_3, %c0_4] : memref<8x128xf32, #tpu.memory_space<vmem>>, vector<8x128xf32>
    tpu.vector_store %arg3[%c0_3, %c0_4], %24 {strides = array<i32>} : memref<8x128xf32, #tpu.memory_space<vmem>>, vector<8x128xf32>,
    return
  }
  func.func @transform_0(%arg0: i32) -> (i32, i32) {
    %c0_i32 = arith.constant 0 : i32
    %c0_i32_0 = arith.constant 0 : i32
    return %arg0, %c0_i32 : i32, i32
  }
  func.func @transform_1(%arg0: i32) -> (i32, i32) {
    %c0_i32 = arith.constant 0 : i32
    %c0_i32_0 = arith.constant 0 : i32
    %c0_i32_1 = arith.constant 0 : i32
    return %c0_i32, %c0_i32_0 : i32, i32
  }
  func.func @transform_2(%arg0: i32) -> (i32, i32) {
    %c0_i32 = arith.constant 0 : i32
    %c0_i32_0 = arith.constant 0 : i32
    return %arg0, %c0_i32 : i32, i32
  }
}

</mosaic_0001>

<llo_original>
// kernel: tpu_custom_call.1
$region0: #{tpu_custom_call.1}
  #allocation0 [shape = 'u32[]', space=smem, size = 0x4, offset = 0x4, fixed_abs, tag = 'smem constant byte address 0x4 - core index']
  #allocation1 [shape = 'u32[72,128]{1,0:T(1,128)}', space=vmem, size = 0x9000, scoped, tag = 'internal scratch']
  %s0 = inlined_call_operand.vmem [shape: s32[8,4], index: 0, kind: input, shape index: {}]
  %s1 = inlined_call_operand.hbm [shape: f32[512,128], index: 1, kind: input, shape index: {}]
  %s2 = inlined_call_operand.hbm [shape: f32[8,128], index: 2, kind: output, shape index: {}]
  %s3 = sld [smem:[#allocation0]]
  $region22: #{tpu_custom_call.1} parent=0
    _
  %s5 = ssub.s32 1, %s3
  %s6 = scalar_select 0, %s5, %s3
  $region1: #{tpu_custom_call.1} parent=0
    #allocation2 [shape = 'u8[262144]{0}', space=vmem, size = 0x40000, scoped, tag = 'input window, operand 1, single buffered']
    #allocation3 [shape = 's32[1]{0}', space=sflag, size = 0x4, scoped, tag = 'scoped memory for tpu_custom_call.1']
    #allocation4 [shape = 's32[1]{0}', space=sflag, size = 0x4, scoped, tag = 'scoped memory for tpu_custom_call.1']
    #allocation5 [shape = 'u8[4096]{0}', space=vmem, size = 0x1000, scoped, tag = 'output window, operand 0, single buffered']
    %7 = vsyncpa [#allocation3], 0
    %8 = vsyncpa [#allocation4], 0
    // Predicated region
    $region2: #{tpu_custom_call.1} parent=1 // pred_check
      _
    $region3: #{tpu_custom_call.1} parent=1 // pred_check_branch
      %10 = sbr.rel (0) target = $region5
    $region4: #{tpu_custom_call.1} parent=1 // pred_region
      _
    $region5: #{tpu_custom_call.1} parent=1 // pred_fallthru
      _
    // Predicated region
    $region6: #{tpu_custom_call.1} parent=1 // pred_check
      _
    $region7: #{tpu_custom_call.1} parent=1 // pred_check_branch
      %12 = sbr.rel (0) target = $region9
    $region8: #{tpu_custom_call.1} parent=1 // pred_region
      %14 = vsyncadd [#allocation3], 0
      %s15 = sshll.u32 %s1, 4
      %s16 = int_to_ptr.hbm [resolvable:$true] %s15
      %s17 = sshll.u32 [#allocation2], 4
      %s18 = int_to_ptr.vmem [resolvable:$true] %s17
      %23 = dma.hbm_to_vmem [thread:$0]  %s16, 8192, %s18, [#allocation3], 128, 128, 8
    $region9: #{tpu_custom_call.1} parent=1 // pred_fallthru
      _
    // Predicated region
    $region10: #{tpu_custom_call.1} parent=1 // pred_check
      _
    $region11: #{tpu_custom_call.1} parent=1 // pred_check_branch
      %25 = sbr.rel (0) target = $region13
    $region12: #{tpu_custom_call.1} parent=1 // pred_region
      %27 = dma.done [#allocation3], 8192
    $region13: #{tpu_custom_call.1} parent=1 // pred_fallthru
      _
    %v28 = vld [vmem:[%s0] sm:$0xff]
    %v29 = vlaneseq
    %v30 = vand.u32 %v29, 127
    %31 = vset.pattern.permute.xlu0 0
    %32 = vperm.xlu0 %31, %v28
    %v33 = vpop.permute.xlu0 %32
    %vm34 = vcmp.eq.s32.totalorder %v30, %v33
    %v35 = vsel %vm34, 1, 0
    %v36 = vcvt.s32.f32 %v35
    %37 = vset.pattern.permute.xlu0 1
    %38 = vperm.xlu0 %37, %v28
    %v39 = vpop.permute.xlu0 %38
    %vm40 = vcmp.eq.s32.totalorder %v30, %v39
    %v41 = vsel %vm40, 1, 0
    %v42 = vcvt.s32.f32 %v41
    %43 = vset.pattern.permute.xlu0 2
    %44 = vperm.xlu0 %43, %v28
    %v45 = vpop.permute.xlu0 %44
    %vm46 = vcmp.eq.s32.totalorder %v30, %v45
    %v47 = vsel %vm46, 1, 0
    %v48 = vcvt.s32.f32 %v47
    %49 = vset.pattern.permute.xlu0 3
    %50 = vperm.xlu0 %49, %v28
    %v51 = vpop.permute.xlu0 %50
    %vm52 = vcmp.eq.s32.totalorder %v30, %v51
    %v53 = vsel %vm52, 1, 0
    %v54 = vcvt.s32.f32 %v53
    %v55 = vld [vmem:[#allocation2] sm:$0xff]
    %v56 = vld [vmem:[#allocation2 + $0x8] sm:$0xff]
    %v57 = vld [vmem:[#allocation2 + $0x10] sm:$0xff]
    %v58 = vld [vmem:[#allocation2 + $0x18] sm:$0xff]
    %v59 = vld [vmem:[#allocation2 + $0x20] sm:$0xff]
    %v60 = vld [vmem:[#allocation2 + $0x28] sm:$0xff]
    %v61 = vld [vmem:[#allocation2 + $0x30] sm:$0xff]
    %v62 = vld [vmem:[#allocation2 + $0x38] sm:$0xff]
    %v63 = vld [vmem:[#allocation2 + $0x40] sm:$0xff]
    %v64 = vld [vmem:[#allocation2 + $0x48] sm:$0xff]
    %v65 = vld [vmem:[#allocation2 + $0x50] sm:$0xff]
    %v66 = vld [vmem:[#allocation2 + $0x58] sm:$0xff]
    %v67 = vld [vmem:[#allocation2 + $0x60] sm:$0xff]
    %v68 = vld [vmem:[#allocation2 + $0x68] sm:$0xff]
    %v69 = vld [vmem:[#allocation2 + $0x70] sm:$0xff]
    %v70 = vld [vmem:[#allocation2 + $0x78] sm:$0xff]
    %v71 = vld [vmem:[#allocation2 + $0x80] sm:$0xff]
    %v72 = vld [vmem:[#allocation2 + $0x88] sm:$0xff]
    %v73 = vld [vmem:[#allocation2 + $0x90] sm:$0xff]
    %v74 = vld [vmem:[#allocation2 + $0x98] sm:$0xff]
    %v75 = vld [vmem:[#allocation2 + $0xa0] sm:$0xff]
    %v76 = vld [vmem:[#allocation2 + $0xa8] sm:$0xff]
    %v77 = vld [vmem:[#allocation2 + $0xb0] sm:$0xff]
    %v78 = vld [vmem:[#allocation2 + $0xb8] sm:$0xff]
    %v79 = vld [vmem:[#allocation2 + $0xc0] sm:$0xff]
    %v80 = vld [vmem:[#allocation2 + $0xc8] sm:$0xff]
    %v81 = vld [vmem:[#allocation2 + $0xd0] sm:$0xff]
    %v82 = vld [vmem:[#allocation2 + $0xd8] sm:$0xff]
    %v83 = vld [vmem:[#allocation2 + $0xe0] sm:$0xff]
    %v84 = vld [vmem:[#allocation2 + $0xe8] sm:$0xff]
    %v85 = vld [vmem:[#allocation2 + $0xf0] sm:$0xff]
    %v86 = vld [vmem:[#allocation2 + $0xf8] sm:$0xff]
    %v87 = vld [vmem:[#allocation2 + $0x100] sm:$0xff]
    %v88 = vld [vmem:[#allocation2 + $0x108] sm:$0xff]
    %v89 = vld [vmem:[#allocation2 + $0x110] sm:$0xff]
    %v90 = vld [vmem:[#allocation2 + $0x118] sm:$0xff]
    %v91 = vld [vmem:[#allocation2 + $0x120] sm:$0xff]
    %v92 = vld [vmem:[#allocation2 + $0x128] sm:$0xff]
    %v93 = vld [vmem:[#allocation2 + $0x130] sm:$0xff]
    %v94 = vld [vmem:[#allocation2 + $0x138] sm:$0xff]
    %v95 = vld [vmem:[#allocation2 + $0x140] sm:$0xff]
    %v96 = vld [vmem:[#allocation2 + $0x148] sm:$0xff]
    %v97 = vld [vmem:[#allocation2 + $0x150] sm:$0xff]
    %v98 = vld [vmem:[#allocation2 + $0x158] sm:$0xff]
    %v99 = vld [vmem:[#allocation2 + $0x160] sm:$0xff]
    %v100 = vld [vmem:[#allocation2 + $0x168] sm:$0xff]
    %v101 = vld [vmem:[#allocation2 + $0x170] sm:$0xff]
    %v102 = vld [vmem:[#allocation2 + $0x178] sm:$0xff]
    %v103 = vld [vmem:[#allocation2 + $0x180] sm:$0xff]
    %v104 = vld [vmem:[#allocation2 + $0x188] sm:$0xff]
    %v105 = vld [vmem:[#allocation2 + $0x190] sm:$0xff]
    %v106 = vld [vmem:[#allocation2 + $0x198] sm:$0xff]
    %v107 = vld [vmem:[#allocation2 + $0x1a0] sm:$0xff]
    %v108 = vld [vmem:[#allocation2 + $0x1a8] sm:$0xff]
    %v109 = vld [vmem:[#allocation2 + $0x1b0] sm:$0xff]
    %v110 = vld [vmem:[#allocation2 + $0x1b8] sm:$0xff]
    %v111 = vld [vmem:[#allocation2 + $0x1c0] sm:$0xff]
    %v112 = vld [vmem:[#allocation2 + $0x1c8] sm:$0xff]
    %v113 = vld [vmem:[#allocation2 + $0x1d0] sm:$0xff]
    %v114 = vld [vmem:[#allocation2 + $0x1d8] sm:$0xff]
    %v115 = vld [vmem:[#allocation2 + $0x1e0] sm:$0xff]
    %v116 = vld [vmem:[#allocation2 + $0x1e8] sm:$0xff]
    %v117 = vld [vmem:[#allocation2 + $0x1f0] sm:$0xff]
    %v118 = vld [vmem:[#allocation2 + $0x1f8] sm:$0xff]
    %v119 = vand.u32 %v70, 4294901760
    %120 = vmatpush.msra.mxu0 %v119
    %v121 = vand.u32 %v69, 4294901760
    %122 = vmatpush.msra.mxu0 %v121
    %v123 = vand.u32 %v68, 4294901760
    %124 = vmatpush.msra.mxu0 %v123
    %v125 = vand.u32 %v67, 4294901760
    %126 = vmatpush.msra.mxu0 %v125
    %v127 = vand.u32 %v66, 4294901760
    %128 = vmatpush.msra.mxu0 %v127
    %v129 = vand.u32 %v65, 4294901760
    %130 = vmatpush.msra.mxu0 %v129
    %v131 = vand.u32 %v64, 4294901760
    %132 = vmatpush.msra.mxu0 %v131
    %v133 = vand.u32 %v63, 4294901760
    %134 = vmatpush.msra.mxu0 %v133
    %v135 = vand.u32 %v62, 4294901760
    %136 = vmatpush.msra.mxu0 %v135
    %v137 = vand.u32 %v61, 4294901760
    %138 = vmatpush.msra.mxu0 %v137
    %v139 = vand.u32 %v60, 4294901760
    %140 = vmatpush.msra.mxu0 %v139
    %v141 = vand.u32 %v59, 4294901760
    %142 = vmatpush.msra.mxu0 %v141
    %v143 = vand.u32 %v58, 4294901760
    %144 = vmatpush.msra.mxu0 %v143
    %v145 = vand.u32 %v57, 4294901760
    %146 = vmatpush.msra.mxu0 %v145
    %v147 = vand.u32 %v56, 4294901760
    %148 = vmatpush.msra.mxu0 %v147
    %v149 = vand.u32 %v55, 4294901760
    %150 = vmatpush.msra.mxu0 %v149
    %v151 = vand.u32 %v36, 4294901760
    %v152 = vsub.f32 %v36, %v151
    %v153 = vand.u32 %v152, 4294901760
    %v154 = vsub.f32 %v152, %v153
    %v155 = vand.u32 %v154, 4294901760
    %156 = vmatmul.f32.gmra.mxu0 %v155
    %v157 = vpop.f32.mrf.mxu0
    %v158 = vadd.f32 0.0, %v157
    %159 = vdwg.mxu0
    %v160 = vand.u32 %v70, 4294901760
    %v161 = vsub.f32 %v70, %v160
    %v162 = vand.u32 %v161, 4294901760
    %v163 = vsub.f32 %v161, %v162
    %v164 = vand.u32 %v163, 4294901760
    %165 = vmatpush.msra.mxu0 %v164
    %v166 = vand.u32 %v69, 4294901760
    %v167 = vsub.f32 %v69, %v166
    %v168 = vand.u32 %v167, 4294901760
    %v169 = vsub.f32 %v167, %v168
    %v170 = vand.u32 %v169, 4294901760
    %171 = vmatpush.msra.mxu0 %v170
    %v172 = vand.u32 %v68, 4294901760
    %v173 = vsub.f32 %v68, %v172
    %v174 = vand.u32 %v173, 4294901760
    %v175 = vsub.f32 %v173, %v174
    %v176 = vand.u32 %v175, 4294901760
    %177 = vmatpush.msra.mxu0 %v176
    %v178 = vand.u32 %v67, 4294901760
    %v179 = vsub.f32 %v67, %v178
    %v180 = vand.u32 %v179, 4294901760
    %v181 = vsub.f32 %v179, %v180
    %v182 = vand.u32 %v181, 4294901760
    %183 = vmatpush.msra.mxu0 %v182
    %v184 = vand.u32 %v66, 4294901760
    %v185 = vsub.f32 %v66, %v184
    %v186 = vand.u32 %v185, 4294901760
    %v187 = vsub.f32 %v185, %v186
    %v188 = vand.u32 %v187, 4294901760
    %189 = vmatpush.msra.mxu0 %v188
    %v190 = vand.u32 %v65, 4294901760
    %v191 = vsub.f32 %v65, %v190
    %v192 = vand.u32 %v191, 4294901760
    %v193 = vsub.f32 %v191, %v192
    %v194 = vand.u32 %v193, 4294901760
    %195 = vmatpush.msra.mxu0 %v194
    %v196 = vand.u32 %v64, 4294901760
    %v197 = vsub.f32 %v64, %v196
    %v198 = vand.u32 %v197, 4294901760
    %v199 = vsub.f32 %v197, %v198
    %v200 = vand.u32 %v199, 4294901760
    %201 = vmatpush.msra.mxu0 %v200
    %v202 = vand.u32 %v63, 4294901760
    %v203 = vsub.f32 %v63, %v202
    %v204 = vand.u32 %v203, 4294901760
    %v205 = vsub.f32 %v203, %v204
    %v206 = vand.u32 %v205, 4294901760
    %207 = vmatpush.msra.mxu0 %v206
    %v208 = vand.u32 %v62, 4294901760
    %v209 = vsub.f32 %v62, %v208
    %v210 = vand.u32 %v209, 4294901760
    %v211 = vsub.f32 %v209, %v210
    %v212 = vand.u32 %v211, 4294901760
    %213 = vmatpush.msra.mxu0 %v212
    %v214 = vand.u32 %v61, 4294901760
    %v215 = vsub.f32 %v61, %v214
    %v216 = vand.u32 %v215, 4294901760
    %v217 = vsub.f32 %v215, %v216
    %v218 = vand.u32 %v217, 4294901760
    %219 = vmatpush.msra.mxu0 %v218
    %v220 = vand.u32 %v60, 4294901760
    %v221 = vsub.f32 %v60, %v220
    %v222 = vand.u32 %v221, 4294901760
    %v223 = vsub.f32 %v221, %v222
    %v224 = vand.u32 %v223, 4294901760
    %225 = vmatpush.msra.mxu0 %v224
    %v226 = vand.u32 %v59, 4294901760
    %v227 = vsub.f32 %v59, %v226
    %v228 = vand.u32 %v227, 4294901760
    %v229 = vsub.f32 %v227, %v228
    %v230 = vand.u32 %v229, 4294901760
    %231 = vmatpush.msra.mxu0 %v230
    %v232 = vand.u32 %v58, 4294901760
    %v233 = vsub.f32 %v58, %v232
    %v234 = vand.u32 %v233, 4294901760
    %v235 = vsub.f32 %v233, %v234
    %v236 = vand.u32 %v235, 4294901760
    %237 = vmatpush.msra.mxu0 %v236
    %v238 = vand.u32 %v57, 4294901760
    %v239 = vsub.f32 %v57, %v238
    %v240 = vand.u32 %v239, 4294901760
    %v241 = vsub.f32 %v239, %v240
    %v242 = vand.u32 %v241, 4294901760
    %243 = vmatpush.msra.mxu0 %v242
    %v244 = vand.u32 %v56, 4294901760
    %v245 = vsub.f32 %v56, %v244
    %v246 = vand.u32 %v245, 4294901760
    %v247 = vsub.f32 %v245, %v246
    %v248 = vand.u32 %v247, 4294901760
    %249 = vmatpush.msra.mxu0 %v248
    %v250 = vand.u32 %v55, 4294901760
    %v251 = vsub.f32 %v55, %v250
    %v252 = vand.u32 %v251, 4294901760
    %v253 = vsub.f32 %v251, %v252
    %v254 = vand.u32 %v253, 4294901760
    %255 = vmatpush.msra.mxu0 %v254
    %v256 = vand.u32 %v36, 4294901760
    %257 = vmatmul.f32.gmra.mxu0 %v256
    %v258 = vpop.f32.mrf.mxu0
    %v259 = vadd.f32 %v158, %v258
    %260 = vdwg.mxu0
    %v261 = vand.u32 %v70, 4294901760
    %v262 = vsub.f32 %v70, %v261
    %263 = vmatpush.msra.mxu0 %v262
    %v264 = vand.u32 %v69, 4294901760
    %v265 = vsub.f32 %v69, %v264
    %266 = vmatpush.msra.mxu0 %v265
    %v267 = vand.u32 %v68, 4294901760
    %v268 = vsub.f32 %v68, %v267
    %269 = vmatpush.msra.mxu0 %v268
    %v270 = vand.u32 %v67, 4294901760
    %v271 = vsub.f32 %v67, %v270
    %272 = vmatpush.msra.mxu0 %v271
    %v273 = vand.u32 %v66, 4294901760
    %v274 = vsub.f32 %v66, %v273
    %275 = vmatpush.msra.mxu0 %v274
    %v276 = vand.u32 %v65, 4294901760
    %v277 = vsub.f32 %v65, %v276
    %278 = vmatpush.msra.mxu0 %v277
    %v279 = vand.u32 %v64, 4294901760
    %v280 = vsub.f32 %v64, %v279
    %281 = vmatpush.msra.mxu0 %v280
    %v282 = vand.u32 %v63, 4294901760
    %v283 = vsub.f32 %v63, %v282
    %284 = vmatpush.msra.mxu0 %v283
    %v285 = vand.u32 %v62, 4294901760
    %v286 = vsub.f32 %v62, %v285
    %287 = vmatpush.msra.mxu0 %v286
    %v288 = vand.u32 %v61, 4294901760
    %v289 = vsub.f32 %v61, %v288
    %290 = vmatpush.msra.mxu0 %v289
    %v291 = vand.u32 %v60, 4294901760
    %v292 = vsub.f32 %v60, %v291
    %293 = vmatpush.msra.mxu0 %v292
    %v294 = vand.u32 %v59, 4294901760
    %v295 = vsub.f32 %v59, %v294
    %296 = vmatpush.msra.mxu0 %v295
    %v297 = vand.u32 %v58, 4294901760
    %v298 = vsub.f32 %v58, %v297
    %299 = vmatpush.msra.mxu0 %v298
    %v300 = vand.u32 %v57, 4294901760
    %v301 = vsub.f32 %v57, %v300
    %302 = vmatpush.msra.mxu0 %v301
    %v303 = vand.u32 %v56, 4294901760
    %v304 = vsub.f32 %v56, %v303
    %305 = vmatpush.msra.mxu0 %v304
    %v306 = vand.u32 %v55, 4294901760
    %v307 = vsub.f32 %v55, %v306
    %308 = vmatpush.msra.mxu0 %v307
    %v309 = vand.u32 %v36, 4294901760
    %v310 = vsub.f32 %v36, %v309
    %311 = vmatmul.f32.gmra.mxu0 %v310
    %v312 = vpop.f32.mrf.mxu0
    %v313 = vadd.f32 %v259, %v312
    %314 = vdwg.mxu0
    %v315 = vand.u32 %v70, 4294901760
    %316 = vmatpush.msra.mxu0 %v315
    %v317 = vand.u32 %v69, 4294901760
    %318 = vmatpush.msra.mxu0 %v317
    %v319 = vand.u32 %v68, 4294901760
    %320 = vmatpush.msra.mxu0 %v319
    %v321 = vand.u32 %v67, 4294901760
    %322 = vmatpush.msra.mxu0 %v321
    %v323 = vand.u32 %v66, 4294901760
    %324 = vmatpush.msra.mxu0 %v323
    %v325 = vand.u32 %v65, 4294901760
    %326 = vmatpush.msra.mxu0 %v325
    %v327 = vand.u32 %v64, 4294901760
    %328 = vmatpush.msra.mxu0 %v327
    %v329 = vand.u32 %v63, 4294901760
    %330 = vmatpush.msra.mxu0 %v329
    %v331 = vand.u32 %v62, 4294901760
    %332 = vmatpush.msra.mxu0 %v331
    %v333 = vand.u32 %v61, 4294901760
    %334 = vmatpush.msra.mxu0 %v333
    %v335 = vand.u32 %v60, 4294901760
    %336 = vmatpush.msra.mxu0 %v335
    %v337 = vand.u32 %v59, 4294901760
    %338 = vmatpush.msra.mxu0 %v337
    %v339 = vand.u32 %v58, 4294901760
    %340 = vmatpush.msra.mxu0 %v339
    %v341 = vand.u32 %v57, 4294901760
    %342 = vmatpush.msra.mxu0 %v341
    %v343 = vand.u32 %v56, 4294901760
    %344 = vmatpush.msra.mxu0 %v343
    %v345 = vand.u32 %v55, 4294901760
    %346 = vmatpush.msra.mxu0 %v345
    %v347 = vand.u32 %v36, 4294901760
    %v348 = vsub.f32 %v36, %v347
    %v349 = vand.u32 %v348, 4294901760
    %350 = vmatmul.f32.gmra.mxu0 %v349
    %v351 = vpop.f32.mrf.mxu0
    %v352 = vadd.f32 %v313, %v351
    %353 = vdwg.mxu0
    %v354 = vand.u32 %v70, 4294901760
    %v355 = vsub.f32 %v70, %v354
    %v356 = vand.u32 %v355, 4294901760
    %357 = vmatpush.msra.mxu0 %v356
    %v358 = vand.u32 %v69, 4294901760
    %v359 = vsub.f32 %v69, %v358
    %v360 = vand.u32 %v359, 4294901760
    %361 = vmatpush.msra.mxu0 %v360
    %v362 = vand.u32 %v68, 4294901760
    %v363 = vsub.f32 %v68, %v362
    %v364 = vand.u32 %v363, 4294901760
    %365 = vmatpush.msra.mxu0 %v364
    %v366 = vand.u32 %v67, 4294901760
    %v367 = vsub.f32 %v67, %v366
    %v368 = vand.u32 %v367, 4294901760
    %369 = vmatpush.msra.mxu0 %v368
    %v370 = vand.u32 %v66, 4294901760
    %v371 = vsub.f32 %v66, %v370
    %v372 = vand.u32 %v371, 4294901760
    %373 = vmatpush.msra.mxu0 %v372
    %v374 = vand.u32 %v65, 4294901760
    %v375 = vsub.f32 %v65, %v374
    %v376 = vand.u32 %v375, 4294901760
    %377 = vmatpush.msra.mxu0 %v376
    %v378 = vand.u32 %v64, 4294901760
    %v379 = vsub.f32 %v64, %v378
    %v380 = vand.u32 %v379, 4294901760
    %381 = vmatpush.msra.mxu0 %v380
    %v382 = vand.u32 %v63, 4294901760
    %v383 = vsub.f32 %v63, %v382
    %v384 = vand.u32 %v383, 4294901760
    %385 = vmatpush.msra.mxu0 %v384
    %v386 = vand.u32 %v62, 4294901760
    %v387 = vsub.f32 %v62, %v386
    %v388 = vand.u32 %v387, 4294901760
    %389 = vmatpush.msra.mxu0 %v388
    %v390 = vand.u32 %v61, 4294901760
    %v391 = vsub.f32 %v61, %v390
    %v392 = vand.u32 %v391, 4294901760
    %393 = vmatpush.msra.mxu0 %v392
    %v394 = vand.u32 %v60, 4294901760
    %v395 = vsub.f32 %v60, %v394
    %v396 = vand.u32 %v395, 4294901760
    %397 = vmatpush.msra.mxu0 %v396
    %v398 = vand.u32 %v59, 4294901760
    %v399 = vsub.f32 %v59, %v398
    %v400 = vand.u32 %v399, 4294901760
    %401 = vmatpush.msra.mxu0 %v400
    %v402 = vand.u32 %v58, 4294901760
    %v403 = vsub.f32 %v58, %v402
    %v404 = vand.u32 %v403, 4294901760
    %405 = vmatpush.msra.mxu0 %v404
    %v406 = vand.u32 %v57, 4294901760
    %v407 = vsub.f32 %v57, %v406
    %v408 = vand.u32 %v407, 4294901760
    %409 = vmatpush.msra.mxu0 %v408
    %v410 = vand.u32 %v56, 4294901760
    %v411 = vsub.f32 %v56, %v410
    %v412 = vand.u32 %v411, 4294901760
    %413 = vmatpush.msra.mxu0 %v412
    %v414 = vand.u32 %v55, 4294901760
    %v415 = vsub.f32 %v55, %v414
    %v416 = vand.u32 %v415, 4294901760
    %417 = vmatpush.msra.mxu0 %v416
    %v418 = vand.u32 %v36, 4294901760
    %419 = vmatmul.f32.gmra.mxu0 %v418
    %v420 = vpop.f32.mrf.mxu0
    %v421 = vadd.f32 %v352, %v420
    %422 = vdwg.mxu0
    %v423 = vand.u32 %v70, 4294901760
    %424 = vmatpush.msra.mxu0 %v423
    %v425 = vand.u32 %v69, 4294901760
    %426 = vmatpush.msra.mxu0 %v425
    %v427 = vand.u32 %v68, 4294901760
    %428 = vmatpush.msra.mxu0 %v427
    %v429 = vand.u32 %v67, 4294901760
    %430 = vmatpush.msra.mxu0 %v429
    %v431 = vand.u32 %v66, 4294901760
    %432 = vmatpush.msra.mxu0 %v431
    %v433 = vand.u32 %v65, 4294901760
    %434 = vmatpush.msra.mxu0 %v433
    %v435 = vand.u32 %v64, 4294901760
    %436 = vmatpush.msra.mxu0 %v435
    %v437 = vand.u32 %v63, 4294901760
    %438 = vmatpush.msra.mxu0 %v437
    %v439 = vand.u32 %v62, 4294901760
    %440 = vmatpush.msra.mxu0 %v439
    %v441 = vand.u32 %v61, 4294901760
    %442 = vmatpush.msra.mxu0 %v441
    %v443 = vand.u32 %v60, 4294901760
    %444 = vmatpush.msra.mxu0 %v443
    %v445 = vand.u32 %v59, 4294901760
    %446 = vmatpush.msra.mxu0 %v445
    %v447 = vand.u32 %v58, 4294901760
    %448 = vmatpush.msra.mxu0 %v447
    %v449 = vand.u32 %v57, 4294901760
    %450 = vmatpush.msra.mxu0 %v449
    %v451 = vand.u32 %v56, 4294901760
    %452 = vmatpush.msra.mxu0 %v451
    %v453 = vand.u32 %v55, 4294901760
    %454 = vmatpush.msra.mxu0 %v453
    %v455 = vand.u32 %v36, 4294901760
    %456 = vmatmul.f32.gmra.mxu0 %v455
    %v457 = vpop.f32.mrf.mxu0
    %v458 = vadd.f32 %v421, %v457
    %459 = vdwg.mxu0
    %v460 = vand.u32 %v86, 4294901760
    %461 = vmatpush.msra.mxu0 %v460
    %v462 = vand.u32 %v85, 4294901760
    %463 = vmatpush.msra.mxu0 %v462
    %v464 = vand.u32 %v84, 4294901760
    %465 = vmatpush.msra.mxu0 %v464
    %v466 = vand.u32 %v83, 4294901760
    %467 = vmatpush.msra.mxu0 %v466
    %v468 = vand.u32 %v82, 4294901760
    %469 = vmatpush.msra.mxu0 %v468
    %v470 = vand.u32 %v81, 4294901760
    %471 = vmatpush.msra.mxu0 %v470
    %v472 = vand.u32 %v80, 4294901760
    %473 = vmatpush.msra.mxu0 %v472
    %v474 = vand.u32 %v79, 4294901760
    %475 = vmatpush.msra.mxu0 %v474
    %v476 = vand.u32 %v78, 4294901760
    %477 = vmatpush.msra.mxu0 %v476
    %v478 = vand.u32 %v77, 4294901760
    %479 = vmatpush.msra.mxu0 %v478
    %v480 = vand.u32 %v76, 4294901760
    %481 = vmatpush.msra.mxu0 %v480
    %v482 = vand.u32 %v75, 4294901760
    %483 = vmatpush.msra.mxu0 %v482
    %v484 = vand.u32 %v74, 4294901760
    %485 = vmatpush.msra.mxu0 %v484
    %v486 = vand.u32 %v73, 4294901760
    %487 = vmatpush.msra.mxu0 %v486
    %v488 = vand.u32 %v72, 4294901760
    %489 = vmatpush.msra.mxu0 %v488
    %v490 = vand.u32 %v71, 4294901760
    %491 = vmatpush.msra.mxu0 %v490
    %v492 = vand.u32 %v42, 4294901760
    %v493 = vsub.f32 %v42, %v492
    %v494 = vand.u32 %v493, 4294901760
    %v495 = vsub.f32 %v493, %v494
    %v496 = vand.u32 %v495, 4294901760
    %497 = vmatmul.f32.gmra.mxu0 %v496
    %v498 = vpop.f32.mrf.mxu0
    %v499 = vadd.f32 %v458, %v498
    %500 = vdwg.mxu0
    %v501 = vand.u32 %v86, 4294901760
    %v502 = vsub.f32 %v86, %v501
    %v503 = vand.u32 %v502, 4294901760
    %v504 = vsub.f32 %v502, %v503
    %v505 = vand.u32 %v504, 4294901760
    %506 = vmatpush.msra.mxu0 %v505
    %v507 = vand.u32 %v85, 4294901760
    %v508 = vsub.f32 %v85, %v507
    %v509 = vand.u32 %v508, 4294901760
    %v510 = vsub.f32 %v508, %v509
    %v511 = vand.u32 %v510, 4294901760
    %512 = vmatpush.msra.mxu0 %v511
    %v513 = vand.u32 %v84, 4294901760
    %v514 = vsub.f32 %v84, %v513
    %v515 = vand.u32 %v514, 4294901760
    %v516 = vsub.f32 %v514, %v515
    %v517 = vand.u32 %v516, 4294901760
    %518 = vmatpush.msra.mxu0 %v517
    %v519 = vand.u32 %v83, 4294901760
    %v520 = vsub.f32 %v83, %v519
    %v521 = vand.u32 %v520, 4294901760
    %v522 = vsub.f32 %v520, %v521
    %v523 = vand.u32 %v522, 4294901760
    %524 = vmatpush.msra.mxu0 %v523
    %v525 = vand.u32 %v82, 4294901760
    %v526 = vsub.f32 %v82, %v525
    %v527 = vand.u32 %v526, 4294901760
    %v528 = vsub.f32 %v526, %v527
    %v529 = vand.u32 %v528, 4294901760
    %530 = vmatpush.msra.mxu0 %v529
    %v531 = vand.u32 %v81, 4294901760
    %v532 = vsub.f32 %v81, %v531
    %v533 = vand.u32 %v532, 4294901760
    %v534 = vsub.f32 %v532, %v533
    %v535 = vand.u32 %v534, 4294901760
    %536 = vmatpush.msra.mxu0 %v535
    %v537 = vand.u32 %v80, 4294901760
    %v538 = vsub.f32 %v80, %v537
    %v539 = vand.u32 %v538, 4294901760
    %v540 = vsub.f32 %v538, %v539
    %v541 = vand.u32 %v540, 4294901760
    %542 = vmatpush.msra.mxu0 %v541
    %v543 = vand.u32 %v79, 4294901760
    %v544 = vsub.f32 %v79, %v543
    %v545 = vand.u32 %v544, 4294901760
    %v546 = vsub.f32 %v544, %v545
    %v547 = vand.u32 %v546, 4294901760
    %548 = vmatpush.msra.mxu0 %v547
    %v549 = vand.u32 %v78, 4294901760
    %v550 = vsub.f32 %v78, %v549
    %v551 = vand.u32 %v550, 4294901760
    %v552 = vsub.f32 %v550, %v551
    %v553 = vand.u32 %v552, 4294901760
    %554 = vmatpush.msra.mxu0 %v553
    %v555 = vand.u32 %v77, 4294901760
    %v556 = vsub.f32 %v77, %v555
    %v557 = vand.u32 %v556, 4294901760
    %v558 = vsub.f32 %v556, %v557
    %v559 = vand.u32 %v558, 4294901760
    %560 = vmatpush.msra.mxu0 %v559
    %v561 = vand.u32 %v76, 4294901760
    %v562 = vsub.f32 %v76, %v561
    %v563 = vand.u32 %v562, 4294901760
    %v564 = vsub.f32 %v562, %v563
    %v565 = vand.u32 %v564, 4294901760
    %566 = vmatpush.msra.mxu0 %v565
    %v567 = vand.u32 %v75, 4294901760
    %v568 = vsub.f32 %v75, %v567
    %v569 = vand.u32 %v568, 4294901760
    %v570 = vsub.f32 %v568, %v569
    %v571 = vand.u32 %v570, 4294901760
    %572 = vmatpush.msra.mxu0 %v571
    %v573 = vand.u32 %v74, 4294901760
    %v574 = vsub.f32 %v74, %v573
    %v575 = vand.u32 %v574, 4294901760
    %v576 = vsub.f32 %v574, %v575
    %v577 = vand.u32 %v576, 4294901760
    %578 = vmatpush.msra.mxu0 %v577
    %v579 = vand.u32 %v73, 4294901760
    %v580 = vsub.f32 %v73, %v579
    %v581 = vand.u32 %v580, 4294901760
    %v582 = vsub.f32 %v580, %v581
    %v583 = vand.u32 %v582, 4294901760
    %584 = vmatpush.msra.mxu0 %v583
    %v585 = vand.u32 %v72, 4294901760
    %v586 = vsub.f32 %v72, %v585
    %v587 = vand.u32 %v586, 4294901760
    %v588 = vsub.f32 %v586, %v587
    %v589 = vand.u32 %v588, 4294901760
    %590 = vmatpush.msra.mxu0 %v589
    %v591 = vand.u32 %v71, 4294901760
    %v592 = vsub.f32 %v71, %v591
    %v593 = vand.u32 %v592, 4294901760
    %v594 = vsub.f32 %v592, %v593
    %v595 = vand.u32 %v594, 4294901760
    %596 = vmatpush.msra.mxu0 %v595
    %v597 = vand.u32 %v42, 4294901760
    %598 = vmatmul.f32.gmra.mxu0 %v597
    %v599 = vpop.f32.mrf.mxu0
    %v600 = vadd.f32 %v499, %v599
    %601 = vdwg.mxu0
    %v602 = vand.u32 %v86, 4294901760
    %v603 = vsub.f32 %v86, %v602
    %604 = vmatpush.msra.mxu0 %v603
    %v605 = vand.u32 %v85, 4294901760
    %v606 = vsub.f32 %v85, %v605
    %607 = vmatpush.msra.mxu0 %v606
    %v608 = vand.u32 %v84, 4294901760
    %v609 = vsub.f32 %v84, %v608
    %610 = vmatpush.msra.mxu0 %v609
    %v611 = vand.u32 %v83, 4294901760
    %v612 = vsub.f32 %v83, %v611
    %613 = vmatpush.msra.mxu0 %v612
    %v614 = vand.u32 %v82, 4294901760
    %v615 = vsub.f32 %v82, %v614
    %616 = vmatpush.msra.mxu0 %v615
    %v617 = vand.u32 %v81, 4294901760
    %v618 = vsub.f32 %v81, %v617
    %619 = vmatpush.msra.mxu0 %v618
    %v620 = vand.u32 %v80, 4294901760
    %v621 = vsub.f32 %v80, %v620
    %622 = vmatpush.msra.mxu0 %v621
    %v623 = vand.u32 %v79, 4294901760
    %v624 = vsub.f32 %v79, %v623
    %625 = vmatpush.msra.mxu0 %v624
    %v626 = vand.u32 %v78, 4294901760
    %v627 = vsub.f32 %v78, %v626
    %628 = vmatpush.msra.mxu0 %v627
    %v629 = vand.u32 %v77, 4294901760
    %v630 = vsub.f32 %v77, %v629
    %631 = vmatpush.msra.mxu0 %v630
    %v632 = vand.u32 %v76, 4294901760
    %v633 = vsub.f32 %v76, %v632
    %634 = vmatpush.msra.mxu0 %v633
    %v635 = vand.u32 %v75, 4294901760
    %v636 = vsub.f32 %v75, %v635
    %637 = vmatpush.msra.mxu0 %v636
    %v638 = vand.u32 %v74, 4294901760
    %v639 = vsub.f32 %v74, %v638
    %640 = vmatpush.msra.mxu0 %v639
    %v641 = vand.u32 %v73, 4294901760
    %v642 = vsub.f32 %v73, %v641
    %643 = vmatpush.msra.mxu0 %v642
    %v644 = vand.u32 %v72, 4294901760
    %v645 = vsub.f32 %v72, %v644
    %646 = vmatpush.msra.mxu0 %v645
    %v647 = vand.u32 %v71, 4294901760
    %v648 = vsub.f32 %v71, %v647
    %649 = vmatpush.msra.mxu0 %v648
    %v650 = vand.u32 %v42, 4294901760
    %v651 = vsub.f32 %v42, %v650
    %652 = vmatmul.f32.gmra.mxu0 %v651
    %v653 = vpop.f32.mrf.mxu0
    %v654 = vadd.f32 %v600, %v653
    %655 = vdwg.mxu0
    %v656 = vand.u32 %v86, 4294901760
    %657 = vmatpush.msra.mxu0 %v656
    %v658 = vand.u32 %v85, 4294901760
    %659 = vmatpush.msra.mxu0 %v658
    %v660 = vand.u32 %v84, 4294901760
    %661 = vmatpush.msra.mxu0 %v660
    %v662 = vand.u32 %v83, 4294901760
    %663 = vmatpush.msra.mxu0 %v662
    %v664 = vand.u32 %v82, 4294901760
    %665 = vmatpush.msra.mxu0 %v664
    %v666 = vand.u32 %v81, 4294901760
    %667 = vmatpush.msra.mxu0 %v666
    %v668 = vand.u32 %v80, 4294901760
    %669 = vmatpush.msra.mxu0 %v668
    %v670 = vand.u32 %v79, 4294901760
    %671 = vmatpush.msra.mxu0 %v670
    %v672 = vand.u32 %v78, 4294901760
    %673 = vmatpush.msra.mxu0 %v672
    %v674 = vand.u32 %v77, 4294901760
    %675 = vmatpush.msra.mxu0 %v674
    %v676 = vand.u32 %v76, 4294901760
    %677 = vmatpush.msra.mxu0 %v676
    %v678 = vand.u32 %v75, 4294901760
    %679 = vmatpush.msra.mxu0 %v678
    %v680 = vand.u32 %v74, 4294901760
    %681 = vmatpush.msra.mxu0 %v680
    %v682 = vand.u32 %v73, 4294901760
    %683 = vmatpush.msra.mxu0 %v682
    %v684 = vand.u32 %v72, 4294901760
    %685 = vmatpush.msra.mxu0 %v684
    %v686 = vand.u32 %v71, 4294901760
    %687 = vmatpush.msra.mxu0 %v686
    %v688 = vand.u32 %v42, 4294901760
    %v689 = vsub.f32 %v42, %v688
    %v690 = vand.u32 %v689, 4294901760
    %691 = vmatmul.f32.gmra.mxu0 %v690
    %v692 = vpop.f32.mrf.mxu0
    %v693 = vadd.f32 %v654, %v692
    %694 = vdwg.mxu0
    %v695 = vand.u32 %v86, 4294901760
    %v696 = vsub.f32 %v86, %v695
    %v697 = vand.u32 %v696, 4294901760
    %698 = vmatpush.msra.mxu0 %v697
    %v699 = vand.u32 %v85, 4294901760
    %v700 = vsub.f32 %v85, %v699
    %v701 = vand.u32 %v700, 4294901760
    %702 = vmatpush.msra.mxu0 %v701
    %v703 = vand.u32 %v84, 4294901760
    %v704 = vsub.f32 %v84, %v703
    %v705 = vand.u32 %v704, 4294901760
    %706 = vmatpush.msra.mxu0 %v705
    %v707 = vand.u32 %v83, 4294901760
    %v708 = vsub.f32 %v83, %v707
    %v709 = vand.u32 %v708, 4294901760
    %710 = vmatpush.msra.mxu0 %v709
    %v711 = vand.u32 %v82, 4294901760
    %v712 = vsub.f32 %v82, %v711
    %v713 = vand.u32 %v712, 4294901760
    %714 = vmatpush.msra.mxu0 %v713
    %v715 = vand.u32 %v81, 4294901760
    %v716 = vsub.f32 %v81, %v715
    %v717 = vand.u32 %v716, 4294901760
    %718 = vmatpush.msra.mxu0 %v717
    %v719 = vand.u32 %v80, 4294901760
    %v720 = vsub.f32 %v80, %v719
    %v721 = vand.u32 %v720, 4294901760
    %722 = vmatpush.msra.mxu0 %v721
    %v723 = vand.u32 %v79, 4294901760
    %v724 = vsub.f32 %v79, %v723
    %v725 = vand.u32 %v724, 4294901760
    %726 = vmatpush.msra.mxu0 %v725
    %v727 = vand.u32 %v78, 4294901760
    %v728 = vsub.f32 %v78, %v727
    %v729 = vand.u32 %v728, 4294901760
    %730 = vmatpush.msra.mxu0 %v729
    %v731 = vand.u32 %v77, 4294901760
    %v732 = vsub.f32 %v77, %v731
    %v733 = vand.u32 %v732, 4294901760
    %734 = vmatpush.msra.mxu0 %v733
    %v735 = vand.u32 %v76, 4294901760
    %v736 = vsub.f32 %v76, %v735
    %v737 = vand.u32 %v736, 4294901760
    %738 = vmatpush.msra.mxu0 %v737
    %v739 = vand.u32 %v75, 4294901760
    %v740 = vsub.f32 %v75, %v739
    %v741 = vand.u32 %v740, 4294901760
    %742 = vmatpush.msra.mxu0 %v741
    %v743 = vand.u32 %v74, 4294901760
    %v744 = vsub.f32 %v74, %v743
    %v745 = vand.u32 %v744, 4294901760
    %746 = vmatpush.msra.mxu0 %v745
    %v747 = vand.u32 %v73, 4294901760
    %v748 = vsub.f32 %v73, %v747
    %v749 = vand.u32 %v748, 4294901760
    %750 = vmatpush.msra.mxu0 %v749
    %v751 = vand.u32 %v72, 4294901760
    %v752 = vsub.f32 %v72, %v751
    %v753 = vand.u32 %v752, 4294901760
    %754 = vmatpush.msra.mxu0 %v753
    %v755 = vand.u32 %v71, 4294901760
    %v756 = vsub.f32 %v71, %v755
    %v757 = vand.u32 %v756, 4294901760
    %758 = vmatpush.msra.mxu0 %v757
    %v759 = vand.u32 %v42, 4294901760
    %760 = vmatmul.f32.gmra.mxu0 %v759
    %v761 = vpop.f32.mrf.mxu0
    %v762 = vadd.f32 %v693, %v761
    %763 = vdwg.mxu0
    %v764 = vand.u32 %v86, 4294901760
    %765 = vmatpush.msra.mxu0 %v764
    %v766 = vand.u32 %v85, 4294901760
    %767 = vmatpush.msra.mxu0 %v766
    %v768 = vand.u32 %v84, 4294901760
    %769 = vmatpush.msra.mxu0 %v768
    %v770 = vand.u32 %v83, 4294901760
    %771 = vmatpush.msra.mxu0 %v770
    %v772 = vand.u32 %v82, 4294901760
    %773 = vmatpush.msra.mxu0 %v772
    %v774 = vand.u32 %v81, 4294901760
    %775 = vmatpush.msra.mxu0 %v774
    %v776 = vand.u32 %v80, 4294901760
    %777 = vmatpush.msra.mxu0 %v776
    %v778 = vand.u32 %v79, 4294901760
    %779 = vmatpush.msra.mxu0 %v778
    %v780 = vand.u32 %v78, 4294901760
    %781 = vmatpush.msra.mxu0 %v780
    %v782 = vand.u32 %v77, 4294901760
    %783 = vmatpush.msra.mxu0 %v782
    %v784 = vand.u32 %v76, 4294901760
    %785 = vmatpush.msra.mxu0 %v784
    %v786 = vand.u32 %v75, 4294901760
    %787 = vmatpush.msra.mxu0 %v786
    %v788 = vand.u32 %v74, 4294901760
    %789 = vmatpush.msra.mxu0 %v788
    %v790 = vand.u32 %v73, 4294901760
    %791 = vmatpush.msra.mxu0 %v790
    %v792 = vand.u32 %v72, 4294901760
    %793 = vmatpush.msra.mxu0 %v792
    %v794 = vand.u32 %v71, 4294901760
    %795 = vmatpush.msra.mxu0 %v794
    %v796 = vand.u32 %v42, 4294901760
    %797 = vmatmul.f32.gmra.mxu0 %v796
    %v798 = vpop.f32.mrf.mxu0
    %v799 = vadd.f32 %v762, %v798
    %800 = vdwg.mxu0
    %v801 = vand.u32 %v102, 4294901760
    %802 = vmatpush.msra.mxu0 %v801
    %v803 = vand.u32 %v101, 4294901760
    %804 = vmatpush.msra.mxu0 %v803
    %v805 = vand.u32 %v100, 4294901760
    %806 = vmatpush.msra.mxu0 %v805
    %v807 = vand.u32 %v99, 4294901760
    %808 = vmatpush.msra.mxu0 %v807
    %v809 = vand.u32 %v98, 4294901760
    %810 = vmatpush.msra.mxu0 %v809
    %v811 = vand.u32 %v97, 4294901760
    %812 = vmatpush.msra.mxu0 %v811
    %v813 = vand.u32 %v96, 4294901760
    %814 = vmatpush.msra.mxu0 %v813
    %v815 = vand.u32 %v95, 4294901760
    %816 = vmatpush.msra.mxu0 %v815
    %v817 = vand.u32 %v94, 4294901760
    %818 = vmatpush.msra.mxu0 %v817
    %v819 = vand.u32 %v93, 4294901760
    %820 = vmatpush.msra.mxu0 %v819
    %v821 = vand.u32 %v92, 4294901760
    %822 = vmatpush.msra.mxu0 %v821
    %v823 = vand.u32 %v91, 4294901760
    %824 = vmatpush.msra.mxu0 %v823
    %v825 = vand.u32 %v90, 4294901760
    %826 = vmatpush.msra.mxu0 %v825
    %v827 = vand.u32 %v89, 4294901760
    %828 = vmatpush.msra.mxu0 %v827
    %v829 = vand.u32 %v88, 4294901760
    %830 = vmatpush.msra.mxu0 %v829
    %v831 = vand.u32 %v87, 4294901760
    %832 = vmatpush.msra.mxu0 %v831
    %v833 = vand.u32 %v48, 4294901760
    %v834 = vsub.f32 %v48, %v833
    %v835 = vand.u32 %v834, 4294901760
    %v836 = vsub.f32 %v834, %v835
    %v837 = vand.u32 %v836, 4294901760
    %838 = vmatmul.f32.gmra.mxu0 %v837
    %v839 = vpop.f32.mrf.mxu0
    %v840 = vadd.f32 %v799, %v839
    %841 = vdwg.mxu0
    %v842 = vand.u32 %v102, 4294901760
    %v843 = vsub.f32 %v102, %v842
    %v844 = vand.u32 %v843, 4294901760
    %v845 = vsub.f32 %v843, %v844
    %v846 = vand.u32 %v845, 4294901760
    %847 = vmatpush.msra.mxu0 %v846
    %v848 = vand.u32 %v101, 4294901760
    %v849 = vsub.f32 %v101, %v848
    %v850 = vand.u32 %v849, 4294901760
    %v851 = vsub.f32 %v849, %v850
    %v852 = vand.u32 %v851, 4294901760
    %853 = vmatpush.msra.mxu0 %v852
    %v854 = vand.u32 %v100, 4294901760
    %v855 = vsub.f32 %v100, %v854
    %v856 = vand.u32 %v855, 4294901760
    %v857 = vsub.f32 %v855, %v856
    %v858 = vand.u32 %v857, 4294901760
    %859 = vmatpush.msra.mxu0 %v858
    %v860 = vand.u32 %v99, 4294901760
    %v861 = vsub.f32 %v99, %v860
    %v862 = vand.u32 %v861, 4294901760
    %v863 = vsub.f32 %v861, %v862
    %v864 = vand.u32 %v863, 4294901760
    %865 = vmatpush.msra.mxu0 %v864
    %v866 = vand.u32 %v98, 4294901760
    %v867 = vsub.f32 %v98, %v866
    %v868 = vand.u32 %v867, 4294901760
    %v869 = vsub.f32 %v867, %v868
    %v870 = vand.u32 %v869, 4294901760
    %871 = vmatpush.msra.mxu0 %v870
    %v872 = vand.u32 %v97, 4294901760
    %v873 = vsub.f32 %v97, %v872
    %v874 = vand.u32 %v873, 4294901760
    %v875 = vsub.f32 %v873, %v874
    %v876 = vand.u32 %v875, 4294901760
    %877 = vmatpush.msra.mxu0 %v876
    %v878 = vand.u32 %v96, 4294901760
    %v879 = vsub.f32 %v96, %v878
    %v880 = vand.u32 %v879, 4294901760
    %v881 = vsub.f32 %v879, %v880
    %v882 = vand.u32 %v881, 4294901760
    %883 = vmatpush.msra.mxu0 %v882
    %v884 = vand.u32 %v95, 4294901760
    %v885 = vsub.f32 %v95, %v884
    %v886 = vand.u32 %v885, 4294901760
    %v887 = vsub.f32 %v885, %v886
    %v888 = vand.u32 %v887, 4294901760
    %889 = vmatpush.msra.mxu0 %v888
    %v890 = vand.u32 %v94, 4294901760
    %v891 = vsub.f32 %v94, %v890
    %v892 = vand.u32 %v891, 4294901760
    %v893 = vsub.f32 %v891, %v892
    %v894 = vand.u32 %v893, 4294901760
    %895 = vmatpush.msra.mxu0 %v894
    %v896 = vand.u32 %v93, 4294901760
    %v897 = vsub.f32 %v93, %v896
    %v898 = vand.u32 %v897, 4294901760
    %v899 = vsub.f32 %v897, %v898
    %v900 = vand.u32 %v899, 4294901760
    %901 = vmatpush.msra.mxu0 %v900
    %v902 = vand.u32 %v92, 4294901760
    %v903 = vsub.f32 %v92, %v902
    %v904 = vand.u32 %v903, 4294901760
    %v905 = vsub.f32 %v903, %v904
    %v906 = vand.u32 %v905, 4294901760
    %907 = vmatpush.msra.mxu0 %v906
    %v908 = vand.u32 %v91, 4294901760
    %v909 = vsub.f32 %v91, %v908
    %v910 = vand.u32 %v909, 4294901760
    %v911 = vsub.f32 %v909, %v910
    %v912 = vand.u32 %v911, 4294901760
    %913 = vmatpush.msra.mxu0 %v912
    %v914 = vand.u32 %v90, 4294901760
    %v915 = vsub.f32 %v90, %v914
    %v916 = vand.u32 %v915, 4294901760
    %v917 = vsub.f32 %v915, %v916
    %v918 = vand.u32 %v917, 4294901760
    %919 = vmatpush.msra.mxu0 %v918
    %v920 = vand.u32 %v89, 4294901760
    %v921 = vsub.f32 %v89, %v920
    %v922 = vand.u32 %v921, 4294901760
    %v923 = vsub.f32 %v921, %v922
    %v924 = vand.u32 %v923, 4294901760
    %925 = vmatpush.msra.mxu0 %v924
    %v926 = vand.u32 %v88, 4294901760
    %v927 = vsub.f32 %v88, %v926
    %v928 = vand.u32 %v927, 4294901760
    %v929 = vsub.f32 %v927, %v928
    %v930 = vand.u32 %v929, 4294901760
    %931 = vmatpush.msra.mxu0 %v930
    %v932 = vand.u32 %v87, 4294901760
    %v933 = vsub.f32 %v87, %v932
    %v934 = vand.u32 %v933, 4294901760
    %v935 = vsub.f32 %v933, %v934
    %v936 = vand.u32 %v935, 4294901760
    %937 = vmatpush.msra.mxu0 %v936
    %v938 = vand.u32 %v48, 4294901760
    %939 = vmatmul.f32.gmra.mxu0 %v938
    %v940 = vpop.f32.mrf.mxu0
    %v941 = vadd.f32 %v840, %v940
    %942 = vdwg.mxu0
    %v943 = vand.u32 %v102, 4294901760
    %v944 = vsub.f32 %v102, %v943
    %945 = vmatpush.msra.mxu0 %v944
    %v946 = vand.u32 %v101, 4294901760
    %v947 = vsub.f32 %v101, %v946
    %948 = vmatpush.msra.mxu0 %v947
    %v949 = vand.u32 %v100, 4294901760
    %v950 = vsub.f32 %v100, %v949
    %951 = vmatpush.msra.mxu0 %v950
    %v952 = vand.u32 %v99, 4294901760
    %v953 = vsub.f32 %v99, %v952
    %954 = vmatpush.msra.mxu0 %v953
    %v955 = vand.u32 %v98, 4294901760
    %v956 = vsub.f32 %v98, %v955
    %957 = vmatpush.msra.mxu0 %v956
    %v958 = vand.u32 %v97, 4294901760
    %v959 = vsub.f32 %v97, %v958
    %960 = vmatpush.msra.mxu0 %v959
    %v961 = vand.u32 %v96, 4294901760
    %v962 = vsub.f32 %v96, %v961
    %963 = vmatpush.msra.mxu0 %v962
    %v964 = vand.u32 %v95, 4294901760
    %v965 = vsub.f32 %v95, %v964
    %966 = vmatpush.msra.mxu0 %v965
    %v967 = vand.u32 %v94, 4294901760
    %v968 = vsub.f32 %v94, %v967
    %969 = vmatpush.msra.mxu0 %v968
    %v970 = vand.u32 %v93, 4294901760
    %v971 = vsub.f32 %v93, %v970
    %972 = vmatpush.msra.mxu0 %v971
    %v973 = vand.u32 %v92, 4294901760
    %v974 = vsub.f32 %v92, %v973
    %975 = vmatpush.msra.mxu0 %v974
    %v976 = vand.u32 %v91, 4294901760
    %v977 = vsub.f32 %v91, %v976
    %978 = vmatpush.msra.mxu0 %v977
    %v979 = vand.u32 %v90, 4294901760
    %v980 = vsub.f32 %v90, %v979
    %981 = vmatpush.msra.mxu0 %v980
    %v982 = vand.u32 %v89, 4294901760
    %v983 = vsub.f32 %v89, %v982
    %984 = vmatpush.msra.mxu0 %v983
    %v985 = vand.u32 %v88, 4294901760
    %v986 = vsub.f32 %v88, %v985
    %987 = vmatpush.msra.mxu0 %v986
    %v988 = vand.u32 %v87, 4294901760
    %v989 = vsub.f32 %v87, %v988
    %990 = vmatpush.msra.mxu0 %v989
    %v991 = vand.u32 %v48, 4294901760
    %v992 = vsub.f32 %v48, %v991
    %993 = vmatmul.f32.gmra.mxu0 %v992
    %v994 = vpop.f32.mrf.mxu0
    %v995 = vadd.f32 %v941, %v994
    %996 = vdwg.mxu0
    %v997 = vand.u32 %v102, 4294901760
    %998 = vmatpush.msra.mxu0 %v997
    %v999 = vand.u32 %v101, 4294901760
    %1000 = vmatpush.msra.mxu0 %v999
    %v1001 = vand.u32 %v100, 4294901760
    %1002 = vmatpush.msra.mxu0 %v1001
    %v1003 = vand.u32 %v99, 4294901760
    %1004 = vmatpush.msra.mxu0 %v1003
    %v1005 = vand.u32 %v98, 4294901760
    %1006 = vmatpush.msra.mxu0 %v1005
    %v1007 = vand.u32 %v97, 4294901760
    %1008 = vmatpush.msra.mxu0 %v1007
    %v1009 = vand.u32 %v96, 4294901760
    %1010 = vmatpush.msra.mxu0 %v1009
    %v1011 = vand.u32 %v95, 4294901760
    %1012 = vmatpush.msra.mxu0 %v1011
    %v1013 = vand.u32 %v94, 4294901760
    %1014 = vmatpush.msra.mxu0 %v1013
    %v1015 = vand.u32 %v93, 4294901760
    %1016 = vmatpush.msra.mxu0 %v1015
    %v1017 = vand.u32 %v92, 4294901760
    %1018 = vmatpush.msra.mxu0 %v1017
    %v1019 = vand.u32 %v91, 4294901760
    %1020 = vmatpush.msra.mxu0 %v1019
    %v1021 = vand.u32 %v90, 4294901760
    %1022 = vmatpush.msra.mxu0 %v1021
    %v1023 = vand.u32 %v89, 4294901760
    %1024 = vmatpush.msra.mxu0 %v1023
    %v1025 = vand.u32 %v88, 4294901760
    %1026 = vmatpush.msra.mxu0 %v1025
    %v1027 = vand.u32 %v87, 4294901760
    %1028 = vmatpush.msra.mxu0 %v1027
    %v1029 = vand.u32 %v48, 4294901760
    %v1030 = vsub.f32 %v48, %v1029
    %v1031 = vand.u32 %v1030, 4294901760
    %1032 = vmatmul.f32.gmra.mxu0 %v1031
    %v1033 = vpop.f32.mrf.mxu0
    %v1034 = vadd.f32 %v995, %v1033
    %1035 = vdwg.mxu0
    %v1036 = vand.u32 %v102, 4294901760
    %v1037 = vsub.f32 %v102, %v1036
    %v1038 = vand.u32 %v1037, 4294901760
    %1039 = vmatpush.msra.mxu0 %v1038
    %v1040 = vand.u32 %v101, 4294901760
    %v1041 = vsub.f32 %v101, %v1040
    %v1042 = vand.u32 %v1041, 4294901760
    %1043 = vmatpush.msra.mxu0 %v1042
    %v1044 = vand.u32 %v100, 4294901760
    %v1045 = vsub.f32 %v100, %v1044
    %v1046 = vand.u32 %v1045, 4294901760
    %1047 = vmatpush.msra.mxu0 %v1046
    %v1048 = vand.u32 %v99, 4294901760
    %v1049 = vsub.f32 %v99, %v1048
    %v1050 = vand.u32 %v1049, 4294901760
    %1051 = vmatpush.msra.mxu0 %v1050
    %v1052 = vand.u32 %v98, 4294901760
    %v1053 = vsub.f32 %v98, %v1052
    %v1054 = vand.u32 %v1053, 4294901760
    %1055 = vmatpush.msra.mxu0 %v1054
    %v1056 = vand.u32 %v97, 4294901760
    %v1057 = vsub.f32 %v97, %v1056
    %v1058 = vand.u32 %v1057, 4294901760
    %1059 = vmatpush.msra.mxu0 %v1058
    %v1060 = vand.u32 %v96, 4294901760
    %v1061 = vsub.f32 %v96, %v1060
    %v1062 = vand.u32 %v1061, 4294901760
    %1063 = vmatpush.msra.mxu0 %v1062
    %v1064 = vand.u32 %v95, 4294901760
    %v1065 = vsub.f32 %v95, %v1064
    %v1066 = vand.u32 %v1065, 4294901760
    %1067 = vmatpush.msra.mxu0 %v1066
    %v1068 = vand.u32 %v94, 4294901760
    %v1069 = vsub.f32 %v94, %v1068
    %v1070 = vand.u32 %v1069, 4294901760
    %1071 = vmatpush.msra.mxu0 %v1070
    %v1072 = vand.u32 %v93, 4294901760
    %v1073 = vsub.f32 %v93, %v1072
    %v1074 = vand.u32 %v1073, 4294901760
    %1075 = vmatpush.msra.mxu0 %v1074
    %v1076 = vand.u32 %v92, 4294901760
    %v1077 = vsub.f32 %v92, %v1076
    %v1078 = vand.u32 %v1077, 4294901760
    %1079 = vmatpush.msra.mxu0 %v1078
    %v1080 = vand.u32 %v91, 4294901760
    %v1081 = vsub.f32 %v91, %v1080
    %v1082 = vand.u32 %v1081, 4294901760
    %1083 = vmatpush.msra.mxu0 %v1082
    %v1084 = vand.u32 %v90, 4294901760
    %v1085 = vsub.f32 %v90, %v1084
    %v1086 = vand.u32 %v1085, 4294901760
    %1087 = vmatpush.msra.mxu0 %v1086
    %v1088 = vand.u32 %v89, 4294901760
    %v1089 = vsub.f32 %v89, %v1088
    %v1090 = vand.u32 %v1089, 4294901760
    %1091 = vmatpush.msra.mxu0 %v1090
    %v1092 = vand.u32 %v88, 4294901760
    %v1093 = vsub.f32 %v88, %v1092
    %v1094 = vand.u32 %v1093, 4294901760
    %1095 = vmatpush.msra.mxu0 %v1094
    %v1096 = vand.u32 %v87, 4294901760
    %v1097 = vsub.f32 %v87, %v1096
    %v1098 = vand.u32 %v1097, 4294901760
    %1099 = vmatpush.msra.mxu0 %v1098
    %v1100 = vand.u32 %v48, 4294901760
    %1101 = vmatmul.f32.gmra.mxu0 %v1100
    %v1102 = vpop.f32.mrf.mxu0
    %v1103 = vadd.f32 %v1034, %v1102
    %1104 = vdwg.mxu0
    %v1105 = vand.u32 %v102, 4294901760
    %1106 = vmatpush.msra.mxu0 %v1105
    %v1107 = vand.u32 %v101, 4294901760
    %1108 = vmatpush.msra.mxu0 %v1107
    %v1109 = vand.u32 %v100, 4294901760
    %1110 = vmatpush.msra.mxu0 %v1109
    %v1111 = vand.u32 %v99, 4294901760
    %1112 = vmatpush.msra.mxu0 %v1111
    %v1113 = vand.u32 %v98, 4294901760
    %1114 = vmatpush.msra.mxu0 %v1113
    %v1115 = vand.u32 %v97, 4294901760
    %1116 = vmatpush.msra.mxu0 %v1115
    %v1117 = vand.u32 %v96, 4294901760
    %1118 = vmatpush.msra.mxu0 %v1117
    %v1119 = vand.u32 %v95, 4294901760
    %1120 = vmatpush.msra.mxu0 %v1119
    %v1121 = vand.u32 %v94, 4294901760
    %1122 = vmatpush.msra.mxu0 %v1121
    %v1123 = vand.u32 %v93, 4294901760
    %1124 = vmatpush.msra.mxu0 %v1123
    %v1125 = vand.u32 %v92, 4294901760
    %1126 = vmatpush.msra.mxu0 %v1125
    %v1127 = vand.u32 %v91, 4294901760
    %1128 = vmatpush.msra.mxu0 %v1127
    %v1129 = vand.u32 %v90, 4294901760
    %1130 = vmatpush.msra.mxu0 %v1129
    %v1131 = vand.u32 %v89, 4294901760
    %1132 = vmatpush.msra.mxu0 %v1131
    %v1133 = vand.u32 %v88, 4294901760
    %1134 = vmatpush.msra.mxu0 %v1133
    %v1135 = vand.u32 %v87, 4294901760
    %1136 = vmatpush.msra.mxu0 %v1135
    %v1137 = vand.u32 %v48, 4294901760
    %1138 = vmatmul.f32.gmra.mxu0 %v1137
    %v1139 = vpop.f32.mrf.mxu0
    %v1140 = vadd.f32 %v1103, %v1139
    %1141 = vdwg.mxu0
    %v1142 = vand.u32 %v118, 4294901760
    %1143 = vmatpush.msra.mxu0 %v1142
    %v1144 = vand.u32 %v117, 4294901760
    %1145 = vmatpush.msra.mxu0 %v1144
    %v1146 = vand.u32 %v116, 4294901760
    %1147 = vmatpush.msra.mxu0 %v1146
    %v1148 = vand.u32 %v115, 4294901760
    %1149 = vmatpush.msra.mxu0 %v1148
    %v1150 = vand.u32 %v114, 4294901760
    %1151 = vmatpush.msra.mxu0 %v1150
    %v1152 = vand.u32 %v113, 4294901760
    %1153 = vmatpush.msra.mxu0 %v1152
    %v1154 = vand.u32 %v112, 4294901760
    %1155 = vmatpush.msra.mxu0 %v1154
    %v1156 = vand.u32 %v111, 4294901760
    %1157 = vmatpush.msra.mxu0 %v1156
    %v1158 = vand.u32 %v110, 4294901760
    %1159 = vmatpush.msra.mxu0 %v1158
    %v1160 = vand.u32 %v109, 4294901760
    %1161 = vmatpush.msra.mxu0 %v1160
    %v1162 = vand.u32 %v108, 4294901760
    %1163 = vmatpush.msra.mxu0 %v1162
    %v1164 = vand.u32 %v107, 4294901760
    %1165 = vmatpush.msra.mxu0 %v1164
    %v1166 = vand.u32 %v106, 4294901760
    %1167 = vmatpush.msra.mxu0 %v1166
    %v1168 = vand.u32 %v105, 4294901760
    %1169 = vmatpush.msra.mxu0 %v1168
    %v1170 = vand.u32 %v104, 4294901760
    %1171 = vmatpush.msra.mxu0 %v1170
    %v1172 = vand.u32 %v103, 4294901760
    %1173 = vmatpush.msra.mxu0 %v1172
    %v1174 = vand.u32 %v54, 4294901760
    %v1175 = vsub.f32 %v54, %v1174
    %v1176 = vand.u32 %v1175, 4294901760
    %v1177 = vsub.f32 %v1175, %v1176
    %v1178 = vand.u32 %v1177, 4294901760
    %1179 = vmatmul.f32.gmra.mxu0 %v1178
    %v1180 = vpop.f32.mrf.mxu0
    %v1181 = vadd.f32 %v1140, %v1180
    %1182 = vdwg.mxu0
    %v1183 = vand.u32 %v118, 4294901760
    %v1184 = vsub.f32 %v118, %v1183
    %v1185 = vand.u32 %v1184, 4294901760
    %v1186 = vsub.f32 %v1184, %v1185
    %v1187 = vand.u32 %v1186, 4294901760
    %1188 = vmatpush.msra.mxu0 %v1187
    %v1189 = vand.u32 %v117, 4294901760
    %v1190 = vsub.f32 %v117, %v1189
    %v1191 = vand.u32 %v1190, 4294901760
    %v1192 = vsub.f32 %v1190, %v1191
    %v1193 = vand.u32 %v1192, 4294901760
    %1194 = vmatpush.msra.mxu0 %v1193
    %v1195 = vand.u32 %v116, 4294901760
    %v1196 = vsub.f32 %v116, %v1195
    %v1197 = vand.u32 %v1196, 4294901760
    %v1198 = vsub.f32 %v1196, %v1197
    %v1199 = vand.u32 %v1198, 4294901760
    %1200 = vmatpush.msra.mxu0 %v1199
    %v1201 = vand.u32 %v115, 4294901760
    %v1202 = vsub.f32 %v115, %v1201
    %v1203 = vand.u32 %v1202, 4294901760
    %v1204 = vsub.f32 %v1202, %v1203
    %v1205 = vand.u32 %v1204, 4294901760
    %1206 = vmatpush.msra.mxu0 %v1205
    %v1207 = vand.u32 %v114, 4294901760
    %v1208 = vsub.f32 %v114, %v1207
    %v1209 = vand.u32 %v1208, 4294901760
    %v1210 = vsub.f32 %v1208, %v1209
    %v1211 = vand.u32 %v1210, 4294901760
    %1212 = vmatpush.msra.mxu0 %v1211
    %v1213 = vand.u32 %v113, 4294901760
    %v1214 = vsub.f32 %v113, %v1213
    %v1215 = vand.u32 %v1214, 4294901760
    %v1216 = vsub.f32 %v1214, %v1215
    %v1217 = vand.u32 %v1216, 4294901760
    %1218 = vmatpush.msra.mxu0 %v1217
    %v1219 = vand.u32 %v112, 4294901760
    %v1220 = vsub.f32 %v112, %v1219
    %v1221 = vand.u32 %v1220, 4294901760
    %v1222 = vsub.f32 %v1220, %v1221
    %v1223 = vand.u32 %v1222, 4294901760
    %1224 = vmatpush.msra.mxu0 %v1223
    %v1225 = vand.u32 %v111, 4294901760
    %v1226 = vsub.f32 %v111, %v1225
    %v1227 = vand.u32 %v1226, 4294901760
    %v1228 = vsub.f32 %v1226, %v1227
    %v1229 = vand.u32 %v1228, 4294901760
    %1230 = vmatpush.msra.mxu0 %v1229
    %v1231 = vand.u32 %v110, 4294901760
    %v1232 = vsub.f32 %v110, %v1231
    %v1233 = vand.u32 %v1232, 4294901760
    %v1234 = vsub.f32 %v1232, %v1233
    %v1235 = vand.u32 %v1234, 4294901760
    %1236 = vmatpush.msra.mxu0 %v1235
    %v1237 = vand.u32 %v109, 4294901760
    %v1238 = vsub.f32 %v109, %v1237
    %v1239 = vand.u32 %v1238, 4294901760
    %v1240 = vsub.f32 %v1238, %v1239
    %v1241 = vand.u32 %v1240, 4294901760
    %1242 = vmatpush.msra.mxu0 %v1241
    %v1243 = vand.u32 %v108, 4294901760
    %v1244 = vsub.f32 %v108, %v1243
    %v1245 = vand.u32 %v1244, 4294901760
    %v1246 = vsub.f32 %v1244, %v1245
    %v1247 = vand.u32 %v1246, 4294901760
    %1248 = vmatpush.msra.mxu0 %v1247
    %v1249 = vand.u32 %v107, 4294901760
    %v1250 = vsub.f32 %v107, %v1249
    %v1251 = vand.u32 %v1250, 4294901760
    %v1252 = vsub.f32 %v1250, %v1251
    %v1253 = vand.u32 %v1252, 4294901760
    %1254 = vmatpush.msra.mxu0 %v1253
    %v1255 = vand.u32 %v106, 4294901760
    %v1256 = vsub.f32 %v106, %v1255
    %v1257 = vand.u32 %v1256, 4294901760
    %v1258 = vsub.f32 %v1256, %v1257
    %v1259 = vand.u32 %v1258, 4294901760
    %1260 = vmatpush.msra.mxu0 %v1259
    %v1261 = vand.u32 %v105, 4294901760
    %v1262 = vsub.f32 %v105, %v1261
    %v1263 = vand.u32 %v1262, 4294901760
    %v1264 = vsub.f32 %v1262, %v1263
    %v1265 = vand.u32 %v1264, 4294901760
    %1266 = vmatpush.msra.mxu0 %v1265
    %v1267 = vand.u32 %v104, 4294901760
    %v1268 = vsub.f32 %v104, %v1267
    %v1269 = vand.u32 %v1268, 4294901760
    %v1270 = vsub.f32 %v1268, %v1269
    %v1271 = vand.u32 %v1270, 4294901760
    %1272 = vmatpush.msra.mxu0 %v1271
    %v1273 = vand.u32 %v103, 4294901760
    %v1274 = vsub.f32 %v103, %v1273
    %v1275 = vand.u32 %v1274, 4294901760
    %v1276 = vsub.f32 %v1274, %v1275
    %v1277 = vand.u32 %v1276, 4294901760
    %1278 = vmatpush.msra.mxu0 %v1277
    %v1279 = vand.u32 %v54, 4294901760
    %1280 = vmatmul.f32.gmra.mxu0 %v1279
    %v1281 = vpop.f32.mrf.mxu0
    %v1282 = vadd.f32 %v1181, %v1281
    %1283 = vdwg.mxu0
    %v1284 = vand.u32 %v118, 4294901760
    %v1285 = vsub.f32 %v118, %v1284
    %1286 = vmatpush.msra.mxu0 %v1285
    %v1287 = vand.u32 %v117, 4294901760
    %v1288 = vsub.f32 %v117, %v1287
    %1289 = vmatpush.msra.mxu0 %v1288
    %v1290 = vand.u32 %v116, 4294901760
    %v1291 = vsub.f32 %v116, %v1290
    %1292 = vmatpush.msra.mxu0 %v1291
    %v1293 = vand.u32 %v115, 4294901760
    %v1294 = vsub.f32 %v115, %v1293
    %1295 = vmatpush.msra.mxu0 %v1294
    %v1296 = vand.u32 %v114, 4294901760
    %v1297 = vsub.f32 %v114, %v1296
    %1298 = vmatpush.msra.mxu0 %v1297
    %v1299 = vand.u32 %v113, 4294901760
    %v1300 = vsub.f32 %v113, %v1299
    %1301 = vmatpush.msra.mxu0 %v1300
    %v1302 = vand.u32 %v112, 4294901760
    %v1303 = vsub.f32 %v112, %v1302
    %1304 = vmatpush.msra.mxu0 %v1303
    %v1305 = vand.u32 %v111, 4294901760
    %v1306 = vsub.f32 %v111, %v1305
    %1307 = vmatpush.msra.mxu0 %v1306
    %v1308 = vand.u32 %v110, 4294901760
    %v1309 = vsub.f32 %v110, %v1308
    %1310 = vmatpush.msra.mxu0 %v1309
    %v1311 = vand.u32 %v109, 4294901760
    %v1312 = vsub.f32 %v109, %v1311
    %1313 = vmatpush.msra.mxu0 %v1312
    %v1314 = vand.u32 %v108, 4294901760
    %v1315 = vsub.f32 %v108, %v1314
    %1316 = vmatpush.msra.mxu0 %v1315
    %v1317 = vand.u32 %v107, 4294901760
    %v1318 = vsub.f32 %v107, %v1317
    %1319 = vmatpush.msra.mxu0 %v1318
    %v1320 = vand.u32 %v106, 4294901760
    %v1321 = vsub.f32 %v106, %v1320
    %1322 = vmatpush.msra.mxu0 %v1321
    %v1323 = vand.u32 %v105, 4294901760
    %v1324 = vsub.f32 %v105, %v1323
    %1325 = vmatpush.msra.mxu0 %v1324
    %v1326 = vand.u32 %v104, 4294901760
    %v1327 = vsub.f32 %v104, %v1326
    %1328 = vmatpush.msra.mxu0 %v1327
    %v1329 = vand.u32 %v103, 4294901760
    %v1330 = vsub.f32 %v103, %v1329
    %1331 = vmatpush.msra.mxu0 %v1330
    %v1332 = vand.u32 %v54, 4294901760
    %v1333 = vsub.f32 %v54, %v1332
    %1334 = vmatmul.f32.gmra.mxu0 %v1333
    %v1335 = vpop.f32.mrf.mxu0
    %v1336 = vadd.f32 %v1282, %v1335
    %1337 = vdwg.mxu0
    %v1338 = vand.u32 %v118, 4294901760
    %1339 = vmatpush.msra.mxu0 %v1338
    %v1340 = vand.u32 %v117, 4294901760
    %1341 = vmatpush.msra.mxu0 %v1340
    %v1342 = vand.u32 %v116, 4294901760
    %1343 = vmatpush.msra.mxu0 %v1342
    %v1344 = vand.u32 %v115, 4294901760
    %1345 = vmatpush.msra.mxu0 %v1344
    %v1346 = vand.u32 %v114, 4294901760
    %1347 = vmatpush.msra.mxu0 %v1346
    %v1348 = vand.u32 %v113, 4294901760
    %1349 = vmatpush.msra.mxu0 %v1348
    %v1350 = vand.u32 %v112, 4294901760
    %1351 = vmatpush.msra.mxu0 %v1350
    %v1352 = vand.u32 %v111, 4294901760
    %1353 = vmatpush.msra.mxu0 %v1352
    %v1354 = vand.u32 %v110, 4294901760
    %1355 = vmatpush.msra.mxu0 %v1354
    %v1356 = vand.u32 %v109, 4294901760
    %1357 = vmatpush.msra.mxu0 %v1356
    %v1358 = vand.u32 %v108, 4294901760
    %1359 = vmatpush.msra.mxu0 %v1358
    %v1360 = vand.u32 %v107, 4294901760
    %1361 = vmatpush.msra.mxu0 %v1360
    %v1362 = vand.u32 %v106, 4294901760
    %1363 = vmatpush.msra.mxu0 %v1362
    %v1364 = vand.u32 %v105, 4294901760
    %1365 = vmatpush.msra.mxu0 %v1364
    %v1366 = vand.u32 %v104, 4294901760
    %1367 = vmatpush.msra.mxu0 %v1366
    %v1368 = vand.u32 %v103, 4294901760
    %1369 = vmatpush.msra.mxu0 %v1368
    %v1370 = vand.u32 %v54, 4294901760
    %v1371 = vsub.f32 %v54, %v1370
    %v1372 = vand.u32 %v1371, 4294901760
    %1373 = vmatmul.f32.gmra.mxu0 %v1372
    %v1374 = vpop.f32.mrf.mxu0
    %v1375 = vadd.f32 %v1336, %v1374
    %1376 = vdwg.mxu0
    %v1377 = vand.u32 %v118, 4294901760
    %v1378 = vsub.f32 %v118, %v1377
    %v1379 = vand.u32 %v1378, 4294901760
    %1380 = vmatpush.msra.mxu0 %v1379
    %v1381 = vand.u32 %v117, 4294901760
    %v1382 = vsub.f32 %v117, %v1381
    %v1383 = vand.u32 %v1382, 4294901760
    %1384 = vmatpush.msra.mxu0 %v1383
    %v1385 = vand.u32 %v116, 4294901760
    %v1386 = vsub.f32 %v116, %v1385
    %v1387 = vand.u32 %v1386, 4294901760
    %1388 = vmatpush.msra.mxu0 %v1387
    %v1389 = vand.u32 %v115, 4294901760
    %v1390 = vsub.f32 %v115, %v1389
    %v1391 = vand.u32 %v1390, 4294901760
    %1392 = vmatpush.msra.mxu0 %v1391
    %v1393 = vand.u32 %v114, 4294901760
    %v1394 = vsub.f32 %v114, %v1393
    %v1395 = vand.u32 %v1394, 4294901760
    %1396 = vmatpush.msra.mxu0 %v1395
    %v1397 = vand.u32 %v113, 4294901760
    %v1398 = vsub.f32 %v113, %v1397
    %v1399 = vand.u32 %v1398, 4294901760
    %1400 = vmatpush.msra.mxu0 %v1399
    %v1401 = vand.u32 %v112, 4294901760
    %v1402 = vsub.f32 %v112, %v1401
    %v1403 = vand.u32 %v1402, 4294901760
    %1404 = vmatpush.msra.mxu0 %v1403
    %v1405 = vand.u32 %v111, 4294901760
    %v1406 = vsub.f32 %v111, %v1405
    %v1407 = vand.u32 %v1406, 4294901760
    %1408 = vmatpush.msra.mxu0 %v1407
    %v1409 = vand.u32 %v110, 4294901760
    %v1410 = vsub.f32 %v110, %v1409
    %v1411 = vand.u32 %v1410, 4294901760
    %1412 = vmatpush.msra.mxu0 %v1411
    %v1413 = vand.u32 %v109, 4294901760
    %v1414 = vsub.f32 %v109, %v1413
    %v1415 = vand.u32 %v1414, 4294901760
    %1416 = vmatpush.msra.mxu0 %v1415
    %v1417 = vand.u32 %v108, 4294901760
    %v1418 = vsub.f32 %v108, %v1417
    %v1419 = vand.u32 %v1418, 4294901760
    %1420 = vmatpush.msra.mxu0 %v1419
    %v1421 = vand.u32 %v107, 4294901760
    %v1422 = vsub.f32 %v107, %v1421
    %v1423 = vand.u32 %v1422, 4294901760
    %1424 = vmatpush.msra.mxu0 %v1423
    %v1425 = vand.u32 %v106, 4294901760
    %v1426 = vsub.f32 %v106, %v1425
    %v1427 = vand.u32 %v1426, 4294901760
    %1428 = vmatpush.msra.mxu0 %v1427
    %v1429 = vand.u32 %v105, 4294901760
    %v1430 = vsub.f32 %v105, %v1429
    %v1431 = vand.u32 %v1430, 4294901760
    %1432 = vmatpush.msra.mxu0 %v1431
    %v1433 = vand.u32 %v104, 4294901760
    %v1434 = vsub.f32 %v104, %v1433
    %v1435 = vand.u32 %v1434, 4294901760
    %1436 = vmatpush.msra.mxu0 %v1435
    %v1437 = vand.u32 %v103, 4294901760
    %v1438 = vsub.f32 %v103, %v1437
    %v1439 = vand.u32 %v1438, 4294901760
    %1440 = vmatpush.msra.mxu0 %v1439
    %v1441 = vand.u32 %v54, 4294901760
    %1442 = vmatmul.f32.gmra.mxu0 %v1441
    %v1443 = vpop.f32.mrf.mxu0
    %v1444 = vadd.f32 %v1375, %v1443
    %1445 = vdwg.mxu0
    %v1446 = vand.u32 %v118, 4294901760
    %1447 = vmatpush.msra.mxu0 %v1446
    %v1448 = vand.u32 %v117, 4294901760
    %1449 = vmatpush.msra.mxu0 %v1448
    %v1450 = vand.u32 %v116, 4294901760
    %1451 = vmatpush.msra.mxu0 %v1450
    %v1452 = vand.u32 %v115, 4294901760
    %1453 = vmatpush.msra.mxu0 %v1452
    %v1454 = vand.u32 %v114, 4294901760
    %1455 = vmatpush.msra.mxu0 %v1454
    %v1456 = vand.u32 %v113, 4294901760
    %1457 = vmatpush.msra.mxu0 %v1456
    %v1458 = vand.u32 %v112, 4294901760
    %1459 = vmatpush.msra.mxu0 %v1458
    %v1460 = vand.u32 %v111, 4294901760
    %1461 = vmatpush.msra.mxu0 %v1460
    %v1462 = vand.u32 %v110, 4294901760
    %1463 = vmatpush.msra.mxu0 %v1462
    %v1464 = vand.u32 %v109, 4294901760
    %1465 = vmatpush.msra.mxu0 %v1464
    %v1466 = vand.u32 %v108, 4294901760
    %1467 = vmatpush.msra.mxu0 %v1466
    %v1468 = vand.u32 %v107, 4294901760
    %1469 = vmatpush.msra.mxu0 %v1468
    %v1470 = vand.u32 %v106, 4294901760
    %1471 = vmatpush.msra.mxu0 %v1470
    %v1472 = vand.u32 %v105, 4294901760
    %1473 = vmatpush.msra.mxu0 %v1472
    %v1474 = vand.u32 %v104, 4294901760
    %1475 = vmatpush.msra.mxu0 %v1474
    %v1476 = vand.u32 %v103, 4294901760
    %1477 = vmatpush.msra.mxu0 %v1476
    %v1478 = vand.u32 %v54, 4294901760
    %1479 = vmatmul.f32.gmra.mxu0 %v1478
    %v1480 = vpop.f32.mrf.mxu0
    %v1481 = vadd.f32 %v1444, %v1480
    %1482 = vdwg.mxu0
    %1483 = vst [vmem:[#allocation5] sm:$0xff] %v1481
    // Predicated region
    $region14: #{tpu_custom_call.1} parent=1 // pred_check
      _
    $region15: #{tpu_custom_call.1} parent=1 // pred_check_branch
      %1485 = sbr.rel (0) target = $region17
    $region16: #{tpu_custom_call.1} parent=1 // pred_region
      %1487 = vsyncadd [#allocation4], 0
      %s1489 = sshll.u32 [#allocation5], 4
      %s1490 = int_to_ptr.vmem [resolvable:$true] %s1489
      %s1491 = sshll.u32 %s2, 4
      %s1492 = int_to_ptr.hbm [resolvable:$true] %s1491
      %1494 = dma.vmem_to_hbm [thread:$0]  %s1490, 128, %s1492, [#allocation4]
    $region17: #{tpu_custom_call.1} parent=1 // pred_fallthru
      _
    // Predicated region
    $region18: #{tpu_custom_call.1} parent=1 // pred_check
      _
    $region19: #{tpu_custom_call.1} parent=1 // pred_check_branch
      %1496 = sbr.rel (0) target = $region21
    $region20: #{tpu_custom_call.1} parent=1 // pred_region
      %1498 = dma.done [#allocation4], 128
    $region21: #{tpu_custom_call.1} parent=1 // pred_fallthru
      _
    %1499 = vsyncpa [#allocation3], 1
    %1500 = vsyncpa [#allocation4], 1

</llo_original>
